<compile_context>
chip_gen: v7x
topology: tpu7x:2x2x1
jax: 0.10.0
libtpu: 0.0.40
codegen_flags: <defaults>
</compile_context>

<pallas_src>
import jax
import jax.numpy as jnp
from jax.experimental import pallas as pl
from jax.experimental.pallas import tpu as pltpu


LAYER_DIMS = [(24, 50), (50, 50), (50, 40), (40, 30), (30, 25), (25, 20)]
N_LAYERS = len(LAYER_DIMS)
IN_DIM = LAYER_DIMS[0][0]     # 24
OUT_DIM = LAYER_DIMS[-1][1]   # 20
DPAD = 64                     # padded feature width (>= all layer dims, multiple of 8)

MAX_BATCH_TILE = 2048         # lane-axis tile; bounded by per-step overhead, not VMEM
MIN_SPLIT_PER_CORE = 512      # don't shard across TensorCores below this per-core size


def _cdiv(a, b):
    return -(-a // b)


def _round_up(a, m):
    return _cdiv(a, m) * m


def _num_tensorcores():
    """Best-effort TensorCore count per chip (v7x has 2, v5e/v6e have 1)."""
    try:
        kind = (getattr(jax.devices()[0], "device_kind", "") or "").lower()
        if "v7" in kind:
            return 2
    except Exception:
        pass
    return 1


def _choose_tiling(batch, num_cores):
    """Pick (tile, num_steps): tile % 128 == 0, tile * num_steps >= batch."""
    num_steps = _cdiv(batch, MAX_BATCH_TILE)
    if num_cores > 1 and batch >= num_cores * MIN_SPLIT_PER_CORE:
        # v7x: give both TensorCores equal work (even number of steps).
        num_steps = _round_up(max(num_steps, num_cores), num_cores)
    tile = _round_up(_cdiv(batch, num_steps), 128)
    return tile, num_steps


def _mlp_kernel(x_ref, w1_ref, w_ref, b_ref, o_ref):
    """Whole 6-layer MLP for one batch tile, feature-major, entirely in VMEM.

    x_ref:  (24, TILE)      f32  -- batch on lanes
    w1_ref: (64, 24)        bf16 -- first-layer weight, (out, in), zero-padded rows
    w_ref:  (5, 64, 64)     bf16 -- layers 2..6, (out, in), zero-padded
    b_ref:  (6, 64, 1)      f32  -- bias columns, zero-padded
    o_ref:  (20, TILE)
    """
    h = x_ref[...].astype(jnp.bfloat16)                              # (24, TILE)

    # Layer 1: (64, 24) x (24, TILE) -> (64, TILE), f32 accumulation.
    y = jnp.dot(w1_ref[...], h, preferred_element_type=jnp.float32)
    y = y + b_ref[0]                                                 # (64, 1) lane-broadcast
    h = jnp.maximum(y, 0.0).astype(jnp.bfloat16)

    for li in range(1, N_LAYERS):
        y = jnp.dot(w_ref[li - 1], h, preferred_element_type=jnp.float32)
        y = y + b_ref[li]
        if li < N_LAYERS - 1:
            h = jnp.maximum(y, 0.0).astype(jnp.bfloat16)

    o_ref[...] = y[:OUT_DIM, :].astype(o_ref.dtype)


def pack_params(params):
    """Pack per-layer (W (in,out), b (1,out)) into transposed, padded blobs.

    Returns (w1 (64,24) bf16, w_rest (5,64,64) bf16, b_blob (6,64,1) f32).
    """
    w1 = jnp.zeros((DPAD, IN_DIM), jnp.float32)
    w_rest = jnp.zeros((N_LAYERS - 1, DPAD, DPAD), jnp.float32)
    b_blob = jnp.zeros((N_LAYERS, DPAD, 1), jnp.float32)

    d0_in, d0_out = LAYER_DIMS[0]
    w0, b0 = params[0]
    w1 = w1.at[:d0_out, :d0_in].set(w0.astype(jnp.float32).T)
    b_blob = b_blob.at[0, :d0_out, 0].set(b0.reshape(-1).astype(jnp.float32))

    for i in range(1, N_LAYERS):
        din, dout = LAYER_DIMS[i]
        w, b = params[i]
        w_rest = w_rest.at[i - 1, :dout, :din].set(w.astype(jnp.float32).T)
        b_blob = b_blob.at[i, :dout, 0].set(b.reshape(-1).astype(jnp.float32))

    return w1.astype(jnp.bfloat16), w_rest.astype(jnp.bfloat16), b_blob


def dlcm_hex_8_6_forward(x, packed):
    """x: (B, 24) float32.  packed: output of pack_params."""
    w1, w_rest, b_blob = packed
    B, in_dim = x.shape
    assert in_dim == IN_DIM, in_dim

    tile, num_steps = _choose_tiling(B, _num_tensorcores())
    b_pad = tile * num_steps

    # Layout plumbing: feature-major so the batch sits on the lane axis.
    x_t = x.T                                    # (24, B)
    if b_pad != B:
        x_t = jnp.pad(x_t, ((0, 0), (0, b_pad - B)))

    # Advisory cost: padded MXU flops; weight bytes counted once.
    flops = 2 * b_pad * (DPAD * IN_DIM + (N_LAYERS - 1) * DPAD * DPAD)
    bytes_accessed = int(b_pad * IN_DIM * 4 + b_pad * OUT_DIM * 4
                         + w1.size * 2 + w_rest.size * 2 + b_blob.size * 4)

    out_t = pl.pallas_call(
        _mlp_kernel,
        out_shape=jax.ShapeDtypeStruct((OUT_DIM, b_pad), x.dtype),
        grid=(num_steps,),
        in_specs=[
            pl.BlockSpec((IN_DIM, tile), lambda i: (0, i)),
            # Constant block indices -> weights/biases stay resident across steps.
            pl.BlockSpec((DPAD, IN_DIM), lambda i: (0, 0)),
            pl.BlockSpec((N_LAYERS - 1, DPAD, DPAD), lambda i: (0, 0, 0)),
            pl.BlockSpec((N_LAYERS, DPAD, 1), lambda i: (0, 0, 0)),
        ],
        out_specs=pl.BlockSpec((OUT_DIM, tile), lambda i: (0, i)),
        compiler_params=pltpu.CompilerParams(
            dimension_semantics=("parallel",),
        ),
        cost_estimate=pl.CostEstimate(
            flops=flops, transcendentals=0, bytes_accessed=bytes_accessed),
    )(x_t, w1, w_rest, b_blob)

    return out_t[:, :B].T


def init_params(key):
    """Deterministic init mirroring PyTorch nn.Linear default:
    U(-1/sqrt(fan_in), 1/sqrt(fan_in)) for both weight and bias.
    Weights stored as (in, out) = W_torch.T."""
    params = []
    for (din, dout) in LAYER_DIMS:
        key, kw, kb = jax.random.split(key, 3)
        bound = 1.0 / jnp.sqrt(jnp.float32(din))
        w = jax.random.uniform(kw, (din, dout), jnp.float32, -bound, bound)
        b = jax.random.uniform(kb, (1, dout), jnp.float32, -bound, bound)
        params.append((w, b))
    return params


def reference_forward(x, params):
    """Pure-JAX f32 reference of the same forward pass (matches PyTorch)."""
    h = x
    for i, (w, b) in enumerate(params):
        h = h @ w + b
        if i < len(params) - 1:
            h = jnp.maximum(h, 0.0)
    return h


def reference_forward_bf16(x, params):
    """Pure-JAX reference with the same bf16-operand / f32-accumulate math
    as the kernel (close correctness check; summation order may differ)."""
    h = x.astype(jnp.float32)
    for i, (w, b) in enumerate(params):
        h = jnp.dot(h.astype(jnp.bfloat16), w.astype(jnp.bfloat16),
                    preferred_element_type=jnp.float32) + b.reshape(1, -1)
        if i < len(params) - 1:
            h = jnp.maximum(h, 0.0)
    return h


if __name__ == "__main__":
    key = jax.random.PRNGKey(0)
    key, kx = jax.random.split(key)

    params = init_params(key)
    packed = pack_params(params)

    # Primary small-shape run: batch 16, hex element flattened features = 8*3 = 24.
    B = 16
    x = jax.random.normal(kx, (B, IN_DIM), dtype=jnp.float32)

    out = jax.block_until_ready(dlcm_hex_8_6_forward(x, packed))
    assert out.shape == (B, OUT_DIM), out.shape

    ref_f32 = reference_forward(x, params)
    ref_b16 = reference_forward_bf16(x, params)
    # bf16-matched reference (tolerance allows MXU summation-order differences).
    assert jnp.allclose(out, ref_b16, atol=2e-3, rtol=2e-3), "mismatch vs bf16 reference"
    # f32 PyTorch-equivalent reference (loose: bf16 operand rounding).
    assert jnp.allclose(out, ref_f32, atol=5e-2, rtol=5e-2), "mismatch vs f32 reference"

    # Non-multiple-of-tile batch exercising the lane-axis padding path.
    key, kx2 = jax.random.split(key)
    B2 = 72
    x2 = jax.random.normal(kx2, (B2, IN_DIM), dtype=jnp.float32)
    out2 = jax.block_until_ready(dlcm_hex_8_6_forward(x2, packed))
    assert out2.shape == (B2, OUT_DIM), out2.shape
    assert jnp.allclose(out2, reference_forward_bf16(x2, params),
                        atol=2e-3, rtol=2e-3), "mismatch vs bf16 reference (B=72)"

    print("KERNEL_OK")
</pallas_src>

<mosaic_0001>
module attributes {stable_mosaic.version = 11 : i64} {
  func.func @_mlp_kernel(%arg0: i32, %arg1: memref<24x128xf32, #tpu.memory_space<vmem>>, %arg2: memref<64x24xbf16, #tpu.memory_space<vmem>>, %arg3: memref<5x64x64xbf16, #tpu.memory_space<vmem>>, %arg4: memref<6x64x1xf32, #tpu.memory_space<vmem>>, %arg5: memref<20x128xf32, #tpu.memory_space<vmem>>) attributes {dimension_semantics = [#tpu.dimension_semantics<parallel>], iteration_bounds = array<i64: 1>, scalar_prefetch = 0 : i64, scratch_operands = 0 : i64, tpu.core_type = #tpu.core_type<tc>, window_params = [{transform_indices = @transform_0, window_bounds = array<i64: 24, 128>}, {pipeline_mode = #tpu.pipeline_mode<synchronous>, transform_indices = @transform_1, window_bounds = array<i64: 64, 24>}, {pipeline_mode = #tpu.pipeline_mode<synchronous>, transform_indices = @transform_2, window_bounds = array<i64: 5, 64, 64>}, {pipeline_mode = #tpu.pipeline_mode<synchronous>, transform_indices = @transform_3, window_bounds = array<i64: 6, 64, 1>}, {transform_indices = @transform_4, window_bounds = array<i64: 20, 128>}]} {
    %c0 = arith.constant 0 : index
    %c0_0 = arith.constant 0 : index
    %0 = vector.load %arg1[%c0, %c0_0] : memref<24x128xf32, #tpu.memory_space<vmem>>, vector<24x128xf32>
    %1 = arith.truncf %0 : vector<24x128xf32> to vector<24x128xbf16>
    %c0_1 = arith.constant 0 : index
    %c0_2 = arith.constant 0 : index
    %2 = vector.load %arg2[%c0_1, %c0_2] : memref<64x24xbf16, #tpu.memory_space<vmem>>, vector<64x24xbf16>
    %cst = arith.constant dense<0.000000e+00> : vector<64x128xf32>
    %3 = tpu.matmul %2, %1, %cst {dimension_numbers = #tpu.dot_dimension_numbers<[1], [0], [0], [1], [0, 0, 1, 1], [], []>} : vector<64x24xbf16>, vector<24x128xbf16>, vector<64x128xf32> -> vector<64x128xf32>
    %c0_3 = arith.constant 0 : index
    %c0_4 = arith.constant 0 : index
    %c0_5 = arith.constant 0 : index
    %4 = vector.load %arg4[%c0_3, %c0_4, %c0_5] : memref<6x64x1xf32, #tpu.memory_space<vmem>>, vector<1x64x1xf32>
    %5 = vector.shape_cast %4 : vector<1x64x1xf32> to vector<64x1xf32>
    %6 = vector.broadcast %5 : vector<64x1xf32> to vector<64x128xf32>
    %7 = arith.addf %3, %6 : vector<64x128xf32>
    %cst_6 = arith.constant 0.000000e+00 : f32
    %8 = vector.broadcast %cst_6 : f32 to vector<64x128xf32>
    %9 = arith.maximumf %7, %8 : vector<64x128xf32>
    %10 = arith.truncf %9 : vector<64x128xf32> to vector<64x128xbf16>
    %c0_7 = arith.constant 0 : index
    %c0_8 = arith.constant 0 : index
    %c0_9 = arith.constant 0 : index
    %11 = vector.load %arg3[%c0_7, %c0_8, %c0_9] : memref<5x64x64xbf16, #tpu.memory_space<vmem>>, vector<1x64x64xbf16>
    %12 = vector.shape_cast %11 : vector<1x64x64xbf16> to vector<64x64xbf16>
    %cst_10 = arith.constant dense<0.000000e+00> : vector<64x128xf32>
    %13 = tpu.matmul %12, %10, %cst_10 {dimension_numbers = #tpu.dot_dimension_numbers<[1], [0], [0], [1], [0, 0, 1, 1], [], []>} : vector<64x64xbf16>, vector<64x128xbf16>, vector<64x128xf32> -> vector<64x128xf32>
    %c1 = arith.constant 1 : index
    %c0_11 = arith.constant 0 : index
    %c0_12 = arith.constant 0 : index
    %14 = vector.load %arg4[%c1, %c0_11, %c0_12] : memref<6x64x1xf32, #tpu.memory_space<vmem>>, vector<1x64x1xf32>
    %15 = vector.shape_cast %14 : vector<1x64x1xf32> to vector<64x1xf32>
    %16 = vector.broadcast %15 : vector<64x1xf32> to vector<64x128xf32>
    %17 = arith.addf %13, %16 : vector<64x128xf32>
    %cst_13 = arith.constant 0.000000e+00 : f32
    %18 = vector.broadcast %cst_13 : f32 to vector<64x128xf32>
    %19 = arith.maximumf %17, %18 : vector<64x128xf32>
    %20 = arith.truncf %19 : vector<64x128xf32> to vector<64x128xbf16>
    %c1_14 = arith.constant 1 : index
    %c0_15 = arith.constant 0 : index
    %c0_16 = arith.constant 0 : index
    %21 = vector.load %arg3[%c1_14, %c0_15, %c0_16] : memref<5x64x64xbf16, #tpu.memory_space<vmem>>, vector<1x64x64xbf16>
    %22 = vector.shape_cast %21 : vector<1x64x64xbf16> to vector<64x64xbf16>
    %cst_17 = arith.constant dense<0.000000e+00> : vector<64x128xf32>
    %23 = tpu.matmul %22, %20, %cst_17 {dimension_numbers = #tpu.dot_dimension_numbers<[1], [0], [0], [1], [0, 0, 1, 1], [], []>} : vector<64x64xbf16>, vector<64x128xbf16>, vector<64x128xf32> -> vector<64x128xf32>
    %c2 = arith.constant 2 : index
    %c0_18 = arith.constant 0 : index
    %c0_19 = arith.constant 0 : index
    %24 = vector.load %arg4[%c2, %c0_18, %c0_19] : memref<6x64x1xf32, #tpu.memory_space<vmem>>, vector<1x64x1xf32>
    %25 = vector.shape_cast %24 : vector<1x64x1xf32> to vector<64x1xf32>
    %26 = vector.broadcast %25 : vector<64x1xf32> to vector<64x128xf32>
    %27 = arith.addf %23, %26 : vector<64x128xf32>
    %cst_20 = arith.constant 0.000000e+00 : f32
    %28 = vector.broadcast %cst_20 : f32 to vector<64x128xf32>
    %29 = arith.maximumf %27, %28 : vector<64x128xf32>
    %30 = arith.truncf %29 : vector<64x128xf32> to vector<64x128xbf16>
    %c2_21 = arith.constant 2 : index
    %c0_22 = arith.constant 0 : index
    %c0_23 = arith.constant 0 : index
    %31 = vector.load %arg3[%c2_21, %c0_22, %c0_23] : memref<5x64x64xbf16, #tpu.memory_space<vmem>>, vector<1x64x64xbf16>
    %32 = vector.shape_cast %31 : vector<1x64x64xbf16> to vector<64x64xbf16>
    %cst_24 = arith.constant dense<0.000000e+00> : vector<64x128xf32>
    %33 = tpu.matmul %32, %30, %cst_24 {dimension_numbers = #tpu.dot_dimension_numbers<[1], [0], [0], [1], [0, 0, 1, 1], [], []>} : vector<64x64xbf16>, vector<64x128xbf16>, vector<64x128xf32> -> vector<64x128xf32>
    %c3 = arith.constant 3 : index
    %c0_25 = arith.constant 0 : index
    %c0_26 = arith.constant 0 : index
    %34 = vector.load %arg4[%c3, %c0_25, %c0_26] : memref<6x64x1xf32, #tpu.memory_space<vmem>>, vector<1x64x1xf32>
    %35 = vector.shape_cast %34 : vector<1x64x1xf32> to vector<64x1xf32>
    %36 = vector.broadcast %35 : vector<64x1xf32> to vector<64x128xf32>
    %37 = arith.addf %33, %36 : vector<64x128xf32>
    %cst_27 = arith.constant 0.000000e+00 : f32
    %38 = vector.broadcast %cst_27 : f32 to vector<64x128xf32>
    %39 = arith.maximumf %37, %38 : vector<64x128xf32>
    %40 = arith.truncf %39 : vector<64x128xf32> to vector<64x128xbf16>
    %c3_28 = arith.constant 3 : index
    %c0_29 = arith.constant 0 : index
    %c0_30 = arith.constant 0 : index
    %41 = vector.load %arg3[%c3_28, %c0_29, %c0_30] : memref<5x64x64xbf16, #tpu.memory_space<vmem>>, vector<1x64x64xbf16>
    %42 = vector.shape_cast %41 : vector<1x64x64xbf16> to vector<64x64xbf16>
    %cst_31 = arith.constant dense<0.000000e+00> : vector<64x128xf32>
    %43 = tpu.matmul %42, %40, %cst_31 {dimension_numbers = #tpu.dot_dimension_numbers<[1], [0], [0], [1], [0, 0, 1, 1], [], []>} : vector<64x64xbf16>, vector<64x128xbf16>, vector<64x128xf32> -> vector<64x128xf32>
    %c4 = arith.constant 4 : index
    %c0_32 = arith.constant 0 : index
    %c0_33 = arith.constant 0 : index
    %44 = vector.load %arg4[%c4, %c0_32, %c0_33] : memref<6x64x1xf32, #tpu.memory_space<vmem>>, vector<1x64x1xf32>
    %45 = vector.shape_cast %44 : vector<1x64x1xf32> to vector<64x1xf32>
    %46 = vector.broadcast %45 : vector<64x1xf32> to vector<64x128xf32>
    %47 = arith.addf %43, %46 : vector<64x128xf32>
    %cst_34 = arith.constant 0.000000e+00 : f32
    %48 = vector.broadcast %cst_34 : f32 to vector<64x128xf32>
    %49 = arith.maximumf %47, %48 : vector<64x128xf32>
    %50 = arith.truncf %49 : vector<64x128xf32> to vector<64x128xbf16>
    %c4_35 = arith.constant 4 : index
    %c0_36 = arith.constant 0 : index
    %c0_37 = arith.constant 0 : index
    %51 = vector.load %arg3[%c4_35, %c0_36, %c0_37] : memref<5x64x64xbf16, #tpu.memory_space<vmem>>, vector<1x64x64xbf16>
    %52 = vector.shape_cast %51 : vector<1x64x64xbf16> to vector<64x64xbf16>
    %cst_38 = arith.constant dense<0.000000e+00> : vector<64x128xf32>
    %53 = tpu.matmul %52, %50, %cst_38 {dimension_numbers = #tpu.dot_dimension_numbers<[1], [0], [0], [1], [0, 0, 1, 1], [], []>} : vector<64x64xbf16>, vector<64x128xbf16>, vector<64x128xf32> -> vector<64x128xf32>
    %c5 = arith.constant 5 : index
    %c0_39 = arith.constant 0 : index
    %c0_40 = arith.constant 0 : index
    %54 = vector.load %arg4[%c5, %c0_39, %c0_40] : memref<6x64x1xf32, #tpu.memory_space<vmem>>, vector<1x64x1xf32>
    %55 = vector.shape_cast %54 : vector<1x64x1xf32> to vector<64x1xf32>
    %56 = vector.broadcast %55 : vector<64x1xf32> to vector<64x128xf32>
    %57 = arith.addf %53, %56 : vector<64x128xf32>
    %58 = vector.extract_strided_slice %57 {offsets = [0, 0], sizes = [20, 128], strides = [1, 1]} : vector<64x128xf32> to vector<20x128xf32>
    %c0_41 = arith.constant 0 : index
    %c0_42 = arith.constant 0 : index
    %59 = vector.load %arg5[%c0_41, %c0_42] : memref<20x128xf32, #tpu.memory_space<vmem>>, vector<20x128xf32>
    tpu.vector_store %arg5[%c0_41, %c0_42], %58 {strides = array<i32>} : memref<20x128xf32, #tpu.memory_space<vmem>>, vector<20x128xf32>,
    return
  }
  func.func @transform_0(%arg0: i32) -> (i32, i32) {
    %c0_i32 = arith.constant 0 : i32
    %c0_i32_0 = arith.constant 0 : i32
    return %c0_i32, %arg0 : i32, i32
  }
  func.func @transform_1(%arg0: i32) -> (i32, i32) {
    %c0_i32 = arith.constant 0 : i32
    %c0_i32_0 = arith.constant 0 : i32
    %c0_i32_1 = arith.constant 0 : i32
    return %c0_i32, %c0_i32_0 : i32, i32
  }
  func.func @transform_2(%arg0: i32) -> (i32, i32, i32) {
    %c0_i32 = arith.constant 0 : i32
    %c0_i32_0 = arith.constant 0 : i32
    %c0_i32_1 = arith.constant 0 : i32
    %c0_i32_2 = arith.constant 0 : i32
    return %c0_i32, %c0_i32_0, %c0_i32_1 : i32, i32, i32
  }
  func.func @transform_3(%arg0: i32) -> (i32, i32, i32) {
    %c0_i32 = arith.constant 0 : i32
    %c0_i32_0 = arith.constant 0 : i32
    %c0_i32_1 = arith.constant 0 : i32
    %c0_i32_2 = arith.constant 0 : i32
    return %c0_i32, %c0_i32_0, %c0_i32_1 : i32, i32, i32
  }
  func.func @transform_4(%arg0: i32) -> (i32, i32) {
    %c0_i32 = arith.constant 0 : i32
    %c0_i32_0 = arith.constant 0 : i32
    return %c0_i32, %arg0 : i32, i32
  }
}

</mosaic_0001>

<llo_original>
// kernel: tpu_custom_call.1
$region0: #{tpu_custom_call.1}
  #allocation0 [shape = 'u32[]', space=smem, size = 0x4, offset = 0x4, fixed_abs, tag = 'smem constant byte address 0x4 - core index']
  #allocation1 [shape = 'u32[144,128]{1,0:T(1,128)}', space=vmem, size = 0x12000, scoped, tag = 'internal scratch']
  %s0 = inlined_call_operand.vmem [shape: f32[24,128], index: 0, kind: input, shape index: {}]
  %s1 = inlined_call_operand.vmem [shape: bf16[64,24], index: 1, kind: input, shape index: {}]
  %s2 = inlined_call_operand.vmem [shape: bf16[5,64,64], index: 2, kind: input, shape index: {}]
  %s3 = inlined_call_operand.vmem [shape: f32[6,64,1], index: 3, kind: input, shape index: {}]
  %s4 = inlined_call_operand.hbm [shape: f32[20,128], index: 4, kind: output, shape index: {}]
  %s5 = sld [smem:[#allocation0]]
  $region26: #{tpu_custom_call.1} parent=0
    _
  %s7 = ssub.s32 1, %s5
  %s8 = scalar_select 0, %s7, %s5
  $region1: #{tpu_custom_call.1} parent=0
    #allocation2 [shape = 'u8[12288]{0}', space=vmem, size = 0x3000, scoped, tag = 'output window, operand 0, single buffered']
    #allocation3 [shape = 's32[1]{0}', space=sflag, size = 0x4, scoped, tag = 'scoped memory for tpu_custom_call.1']
    %9 = vsyncpa [#allocation3], 0
    // Predicated region
    $region2: #{tpu_custom_call.1} parent=1 // pred_check
      _
    $region3: #{tpu_custom_call.1} parent=1 // pred_check_branch
      %11 = sbr.rel (0) target = $region5
    $region4: #{tpu_custom_call.1} parent=1 // pred_region
      _
    $region5: #{tpu_custom_call.1} parent=1 // pred_fallthru
      _
    // Predicated region
    $region6: #{tpu_custom_call.1} parent=1 // pred_check
      _
    $region7: #{tpu_custom_call.1} parent=1 // pred_check_branch
      %13 = sbr.rel (0) target = $region9
    $region8: #{tpu_custom_call.1} parent=1 // pred_region
      _
    $region9: #{tpu_custom_call.1} parent=1 // pred_fallthru
      _
    // Predicated region
    $region10: #{tpu_custom_call.1} parent=1 // pred_check
      _
    $region11: #{tpu_custom_call.1} parent=1 // pred_check_branch
      %15 = sbr.rel (0) target = $region13
    $region12: #{tpu_custom_call.1} parent=1 // pred_region
      _
    $region13: #{tpu_custom_call.1} parent=1 // pred_fallthru
      _
    // Predicated region
    $region14: #{tpu_custom_call.1} parent=1 // pred_check
      _
    $region15: #{tpu_custom_call.1} parent=1 // pred_check_branch
      %17 = sbr.rel (0) target = $region17
    $region16: #{tpu_custom_call.1} parent=1 // pred_region
      _
    $region17: #{tpu_custom_call.1} parent=1 // pred_fallthru
      _
    %v19 = vld [vmem:[%s0] sm:$0xff]
    %v20 = vld [vmem:[%s0 + $0x8] sm:$0xff]
    %v21 = vld [vmem:[%s0 + $0x10] sm:$0xff]
    %v22 = vpack.c.bf16 %v20, %v19
    %v23 = vpack.c.bf16 %v21, %v21
    %v24 = vld [vmem:[%s1] sm:$0xf]
    %v25 = vld [vmem:[%s1 + $0x4] sm:$0xf]
    %v26 = vld [vmem:[%s1 + $0x8] sm:$0xf]
    %v27 = vld [vmem:[%s1 + $0xc] sm:$0xf]
    %v28 = vld [vmem:[%s1 + $0x10] sm:$0xf]
    %v29 = vld [vmem:[%s1 + $0x14] sm:$0xf]
    %v30 = vld [vmem:[%s1 + $0x18] sm:$0xf]
    %v31 = vld [vmem:[%s1 + $0x1c] sm:$0xf]
    %v32 = vld [vmem:[%s3] sm:$0xff]
    %v33 = vld [vmem:[%s3 + $0x8] sm:$0xff]
    %v34 = vld [vmem:[%s3 + $0x10] sm:$0xff]
    %v35 = vld [vmem:[%s3 + $0x18] sm:$0xff]
    %v36 = vld [vmem:[%s3 + $0x20] sm:$0xff]
    %v37 = vld [vmem:[%s3 + $0x28] sm:$0xff]
    %v38 = vld [vmem:[%s3 + $0x30] sm:$0xff]
    %v39 = vld [vmem:[%s3 + $0x38] sm:$0xff]
    %41 = vset.pattern.permute.xlu0 0
    %42 = vperm.xlu0 %41, %v32
    %v43 = vpop.permute.xlu0 %42
    %46 = vset.pattern.permute.xlu0 0
    %47 = vperm.xlu0 %46, %v33
    %v48 = vpop.permute.xlu0 %47
    %51 = vset.pattern.permute.xlu0 0
    %52 = vperm.xlu0 %51, %v34
    %v53 = vpop.permute.xlu0 %52
    %56 = vset.pattern.permute.xlu0 0
    %57 = vperm.xlu0 %56, %v35
    %v58 = vpop.permute.xlu0 %57
    %61 = vset.pattern.permute.xlu0 0
    %62 = vperm.xlu0 %61, %v36
    %v63 = vpop.permute.xlu0 %62
    %66 = vset.pattern.permute.xlu0 0
    %67 = vperm.xlu0 %66, %v37
    %v68 = vpop.permute.xlu0 %67
    %71 = vset.pattern.permute.xlu0 0
    %72 = vperm.xlu0 %71, %v38
    %v73 = vpop.permute.xlu0 %72
    %76 = vset.pattern.permute.xlu0 0
    %77 = vperm.xlu0 %76, %v39
    %v78 = vpop.permute.xlu0 %77
    %v88 = vunpack.c.l.b16 %v24
    %v89 = vunpack.c.l.b16 %v25
    %v90 = vunpack.c.l.b16 %v26
    %v91 = vunpack.c.l.b16 %v27
    %v92 = vunpack.c.l.b16 %v28
    %v93 = vunpack.c.l.b16 %v29
    %v94 = vunpack.c.l.b16 %v30
    %v95 = vunpack.c.l.b16 %v31
    %v96 = vpack.c.b16 %v89, %v88
    %v97 = vpack.c.b16 %v91, %v90
    %v98 = vpack.c.b16 %v93, %v92
    %v99 = vpack.c.b16 %v95, %v94
    %vm100 = vcmask 195584
    %v102 = vsel %vm100, %v96, 0
    %v105 = vsel %vm100, %v97, 0
    %v108 = vsel %vm100, %v98, 0
    %v111 = vsel %vm100, %v99, 0
    %vm113 = vcmask 1043456
    %v115 = vsel %vm113, %v23, 0
    %117 = vmatprep.subr.bf16.mxu0 0
    %118 = vmatpush1.bf16.msra.mxu0 %v22
    %119 = vmatprep.subr.bf16.mxu0 0
    %120 = vmatpush1.bf16.msra.mxu0 %v115
    %121 = vmatprep.subr.bf16.mxu0 0
    %122 = vmatpush1.bf16.msra.mxu0 0
    %123 = vmatprep.subr.bf16.mxu0 0
    %124 = vmatpush1.bf16.msra.mxu0 0
    %125 = vmatprep.subr.bf16.mxu0 0
    %126 = vmatpush1.bf16.msra.mxu0 0
    %127 = vmatprep.subr.bf16.mxu0 0
    %128 = vmatpush1.bf16.msra.mxu0 0
    %129 = vmatprep.subr.bf16.mxu0 0
    %130 = vmatpush1.bf16.msra.mxu0 0
    %131 = vmatprep.subr.bf16.mxu0 0
    %132 = vmatpush1.bf16.msra.mxu0 0
    %133 = vmatprep.subr.bf16.mxu0 0
    %134 = vmatpush1.bf16.msra.mxu0 0
    %135 = vmatprep.subr.bf16.mxu0 0
    %136 = vmatpush1.bf16.msra.mxu0 0
    %137 = vmatprep.subr.bf16.mxu0 0
    %138 = vmatpush1.bf16.msra.mxu0 0
    %139 = vmatprep.subr.bf16.mxu0 0
    %140 = vmatpush1.bf16.msra.mxu0 0
    %141 = vmatprep.subr.bf16.mxu0 0
    %142 = vmatpush1.bf16.msra.mxu0 0
    %143 = vmatprep.subr.bf16.mxu0 0
    %144 = vmatpush1.bf16.msra.mxu0 0
    %145 = vmatprep.subr.bf16.mxu0 0
    %146 = vmatpush1.bf16.msra.mxu0 0
    %147 = vmatprep.subr.bf16.mxu0 0
    %148 = vmatpush1.bf16.msra.mxu0 0
    %149 = vmatprep.mubr.bf16.mxu0 0
    %150 = vmatmul.mubr.bf16.gmra.mrb[0].mxu0 %v102
    %v151 = vpop.f32.mrb[0].mxu0
    %v152 = vadd.f32 %v43, %v151
    %v153 = vpop.f32.mrb[0].mxu0
    %v154 = vpop.f32.mrb[0].mxu0
    %v155 = vadd.f32 %v48, %v154
    %v156 = vpop.f32.mrb[0].mxu0
    %157 = vmatprep.mubr.bf16.mxu0 0
    %158 = vmatmul.mubr.bf16.gmra.mrb[0].mxu0 %v105
    %v159 = vpop.f32.mrb[0].mxu0
    %v160 = vadd.f32 %v53, %v159
    %v161 = vpop.f32.mrb[0].mxu0
    %v162 = vpop.f32.mrb[0].mxu0
    %v163 = vadd.f32 %v58, %v162
    %v164 = vpop.f32.mrb[0].mxu0
    %165 = vmatprep.mubr.bf16.mxu0 0
    %166 = vmatmul.mubr.bf16.gmra.mrb[0].mxu0 %v108
    %v167 = vpop.f32.mrb[0].mxu0
    %v168 = vadd.f32 %v63, %v167
    %v169 = vpop.f32.mrb[0].mxu0
    %v170 = vpop.f32.mrb[0].mxu0
    %v171 = vadd.f32 %v68, %v170
    %v172 = vpop.f32.mrb[0].mxu0
    %173 = vmatprep.mubr.bf16.mxu0 0
    %174 = vmatmul.mubr.bf16.gmra.mrb[0].mxu0 %v111
    %v175 = vpop.f32.mrb[0].mxu0
    %v176 = vadd.f32 %v73, %v175
    %v177 = vpop.f32.mrb[0].mxu0
    %v178 = vpop.f32.mrb[0].mxu0
    %v179 = vadd.f32 %v78, %v178
    %v180 = vpop.f32.mrb[0].mxu0
    %181 = vdwg.mxu0
    %v182 = vmax.f32 %v152, 0.0
    %v183 = vmax.f32 %v155, 0.0
    %v184 = vmax.f32 %v160, 0.0
    %v185 = vmax.f32 %v163, 0.0
    %v186 = vmax.f32 %v168, 0.0
    %v187 = vmax.f32 %v171, 0.0
    %v188 = vmax.f32 %v176, 0.0
    %v189 = vmax.f32 %v179, 0.0
    %v190 = vpack.c.bf16 %v183, %v182
    %v191 = vpack.c.bf16 %v185, %v184
    %v192 = vpack.c.bf16 %v187, %v186
    %v193 = vpack.c.bf16 %v189, %v188
    %v194 = vld [vmem:[%s2] sm:$0xf]
    %v195 = vld [vmem:[%s2 + $0x4] sm:$0xf]
    %v196 = vld [vmem:[%s2 + $0x8] sm:$0xf]
    %v197 = vld [vmem:[%s2 + $0xc] sm:$0xf]
    %v198 = vld [vmem:[%s2 + $0x10] sm:$0xf]
    %v199 = vld [vmem:[%s2 + $0x14] sm:$0xf]
    %v200 = vld [vmem:[%s2 + $0x18] sm:$0xf]
    %v201 = vld [vmem:[%s2 + $0x1c] sm:$0xf]
    %s202 = scalar_lea.vmem %s3, 64
    %v203 = vld [vmem:[%s202] sm:$0xff]
    %v204 = vld [vmem:[%s202 + $0x8] sm:$0xff]
    %v205 = vld [vmem:[%s202 + $0x10] sm:$0xff]
    %v206 = vld [vmem:[%s202 + $0x18] sm:$0xff]
    %v207 = vld [vmem:[%s202 + $0x20] sm:$0xff]
    %v208 = vld [vmem:[%s202 + $0x28] sm:$0xff]
    %v209 = vld [vmem:[%s202 + $0x30] sm:$0xff]
    %v210 = vld [vmem:[%s202 + $0x38] sm:$0xff]
    %212 = vset.pattern.permute.xlu0 0
    %213 = vperm.xlu0 %212, %v203
    %v214 = vpop.permute.xlu0 %213
    %217 = vset.pattern.permute.xlu0 0
    %218 = vperm.xlu0 %217, %v204
    %v219 = vpop.permute.xlu0 %218
    %222 = vset.pattern.permute.xlu0 0
    %223 = vperm.xlu0 %222, %v205
    %v224 = vpop.permute.xlu0 %223
    %227 = vset.pattern.permute.xlu0 0
    %228 = vperm.xlu0 %227, %v206
    %v229 = vpop.permute.xlu0 %228
    %232 = vset.pattern.permute.xlu0 0
    %233 = vperm.xlu0 %232, %v207
    %v234 = vpop.permute.xlu0 %233
    %237 = vset.pattern.permute.xlu0 0
    %238 = vperm.xlu0 %237, %v208
    %v239 = vpop.permute.xlu0 %238
    %242 = vset.pattern.permute.xlu0 0
    %243 = vperm.xlu0 %242, %v209
    %v244 = vpop.permute.xlu0 %243
    %247 = vset.pattern.permute.xlu0 0
    %248 = vperm.xlu0 %247, %v210
    %v249 = vpop.permute.xlu0 %248
    %v259 = vunpack.c.l.b16 %v194
    %v260 = vunpack.c.l.b16 %v195
    %v261 = vunpack.c.l.b16 %v196
    %v262 = vunpack.c.l.b16 %v197
    %v263 = vunpack.c.l.b16 %v198
    %v264 = vunpack.c.l.b16 %v199
    %v265 = vunpack.c.l.b16 %v200
    %v266 = vunpack.c.l.b16 %v201
    %v267 = vpack.c.b16 %v260, %v259
    %v268 = vpack.c.b16 %v262, %v261
    %v269 = vpack.c.b16 %v264, %v263
    %v270 = vpack.c.b16 %v266, %v265
    %vm271 = vcmask 523264
    %v273 = vsel %vm271, %v267, 0
    %v276 = vsel %vm271, %v268, 0
    %v279 = vsel %vm271, %v269, 0
    %v282 = vsel %vm271, %v270, 0
    %284 = vmatprep.subr.bf16.mxu0 0
    %285 = vmatpush1.bf16.msra.mxu0 %v190
    %286 = vmatprep.subr.bf16.mxu0 0
    %287 = vmatpush1.bf16.msra.mxu0 %v191
    %288 = vmatprep.subr.bf16.mxu0 0
    %289 = vmatpush1.bf16.msra.mxu0 %v192
    %290 = vmatprep.subr.bf16.mxu0 0
    %291 = vmatpush1.bf16.msra.mxu0 %v193
    %292 = vmatprep.subr.bf16.mxu0 0
    %293 = vmatpush1.bf16.msra.mxu0 0
    %294 = vmatprep.subr.bf16.mxu0 0
    %295 = vmatpush1.bf16.msra.mxu0 0
    %296 = vmatprep.subr.bf16.mxu0 0
    %297 = vmatpush1.bf16.msra.mxu0 0
    %298 = vmatprep.subr.bf16.mxu0 0
    %299 = vmatpush1.bf16.msra.mxu0 0
    %300 = vmatprep.subr.bf16.mxu0 0
    %301 = vmatpush1.bf16.msra.mxu0 0
    %302 = vmatprep.subr.bf16.mxu0 0
    %303 = vmatpush1.bf16.msra.mxu0 0
    %304 = vmatprep.subr.bf16.mxu0 0
    %305 = vmatpush1.bf16.msra.mxu0 0
    %306 = vmatprep.subr.bf16.mxu0 0
    %307 = vmatpush1.bf16.msra.mxu0 0
    %308 = vmatprep.subr.bf16.mxu0 0
    %309 = vmatpush1.bf16.msra.mxu0 0
    %310 = vmatprep.subr.bf16.mxu0 0
    %311 = vmatpush1.bf16.msra.mxu0 0
    %312 = vmatprep.subr.bf16.mxu0 0
    %313 = vmatpush1.bf16.msra.mxu0 0
    %314 = vmatprep.subr.bf16.mxu0 0
    %315 = vmatpush1.bf16.msra.mxu0 0
    %316 = vmatprep.mubr.bf16.mxu0 0
    %317 = vmatmul.mubr.bf16.gmra.mrb[0].mxu0 %v273
    %v318 = vpop.f32.mrb[0].mxu0
    %v319 = vadd.f32 %v214, %v318
    %v320 = vpop.f32.mrb[0].mxu0
    %v321 = vpop.f32.mrb[0].mxu0
    %v322 = vadd.f32 %v219, %v321
    %v323 = vpop.f32.mrb[0].mxu0
    %324 = vmatprep.mubr.bf16.mxu0 0
    %325 = vmatmul.mubr.bf16.gmra.mrb[0].mxu0 %v276
    %v326 = vpop.f32.mrb[0].mxu0
    %v327 = vadd.f32 %v224, %v326
    %v328 = vpop.f32.mrb[0].mxu0
    %v329 = vpop.f32.mrb[0].mxu0
    %v330 = vadd.f32 %v229, %v329
    %v331 = vpop.f32.mrb[0].mxu0
    %332 = vmatprep.mubr.bf16.mxu0 0
    %333 = vmatmul.mubr.bf16.gmra.mrb[0].mxu0 %v279
    %v334 = vpop.f32.mrb[0].mxu0
    %v335 = vadd.f32 %v234, %v334
    %v336 = vpop.f32.mrb[0].mxu0
    %v337 = vpop.f32.mrb[0].mxu0
    %v338 = vadd.f32 %v239, %v337
    %v339 = vpop.f32.mrb[0].mxu0
    %340 = vmatprep.mubr.bf16.mxu0 0
    %341 = vmatmul.mubr.bf16.gmra.mrb[0].mxu0 %v282
    %v342 = vpop.f32.mrb[0].mxu0
    %v343 = vadd.f32 %v244, %v342
    %v344 = vpop.f32.mrb[0].mxu0
    %v345 = vpop.f32.mrb[0].mxu0
    %v346 = vadd.f32 %v249, %v345
    %v347 = vpop.f32.mrb[0].mxu0
    %348 = vdwg.mxu0
    %v349 = vmax.f32 %v319, 0.0
    %v350 = vmax.f32 %v322, 0.0
    %v351 = vmax.f32 %v327, 0.0
    %v352 = vmax.f32 %v330, 0.0
    %v353 = vmax.f32 %v335, 0.0
    %v354 = vmax.f32 %v338, 0.0
    %v355 = vmax.f32 %v343, 0.0
    %v356 = vmax.f32 %v346, 0.0
    %v357 = vpack.c.bf16 %v350, %v349
    %v358 = vpack.c.bf16 %v352, %v351
    %v359 = vpack.c.bf16 %v354, %v353
    %v360 = vpack.c.bf16 %v356, %v355
    %s361 = scalar_lea.vmem %s2, 32
    %v362 = vld [vmem:[%s361] sm:$0xf]
    %v363 = vld [vmem:[%s361 + $0x4] sm:$0xf]
    %v364 = vld [vmem:[%s361 + $0x8] sm:$0xf]
    %v365 = vld [vmem:[%s361 + $0xc] sm:$0xf]
    %v366 = vld [vmem:[%s361 + $0x10] sm:$0xf]
    %v367 = vld [vmem:[%s361 + $0x14] sm:$0xf]
    %v368 = vld [vmem:[%s361 + $0x18] sm:$0xf]
    %v369 = vld [vmem:[%s361 + $0x1c] sm:$0xf]
    %s370 = scalar_lea.vmem %s3, 128
    %v371 = vld [vmem:[%s370] sm:$0xff]
    %v372 = vld [vmem:[%s370 + $0x8] sm:$0xff]
    %v373 = vld [vmem:[%s370 + $0x10] sm:$0xff]
    %v374 = vld [vmem:[%s370 + $0x18] sm:$0xff]
    %v375 = vld [vmem:[%s370 + $0x20] sm:$0xff]
    %v376 = vld [vmem:[%s370 + $0x28] sm:$0xff]
    %v377 = vld [vmem:[%s370 + $0x30] sm:$0xff]
    %v378 = vld [vmem:[%s370 + $0x38] sm:$0xff]
    %380 = vset.pattern.permute.xlu0 0
    %381 = vperm.xlu0 %380, %v371
    %v382 = vpop.permute.xlu0 %381
    %385 = vset.pattern.permute.xlu0 0
    %386 = vperm.xlu0 %385, %v372
    %v387 = vpop.permute.xlu0 %386
    %390 = vset.pattern.permute.xlu0 0
    %391 = vperm.xlu0 %390, %v373
    %v392 = vpop.permute.xlu0 %391
    %395 = vset.pattern.permute.xlu0 0
    %396 = vperm.xlu0 %395, %v374
    %v397 = vpop.permute.xlu0 %396
    %400 = vset.pattern.permute.xlu0 0
    %401 = vperm.xlu0 %400, %v375
    %v402 = vpop.permute.xlu0 %401
    %405 = vset.pattern.permute.xlu0 0
    %406 = vperm.xlu0 %405, %v376
    %v407 = vpop.permute.xlu0 %406
    %410 = vset.pattern.permute.xlu0 0
    %411 = vperm.xlu0 %410, %v377
    %v412 = vpop.permute.xlu0 %411
    %415 = vset.pattern.permute.xlu0 0
    %416 = vperm.xlu0 %415, %v378
    %v417 = vpop.permute.xlu0 %416
    %v427 = vunpack.c.l.b16 %v362
    %v428 = vunpack.c.l.b16 %v363
    %v429 = vunpack.c.l.b16 %v364
    %v430 = vunpack.c.l.b16 %v365
    %v431 = vunpack.c.l.b16 %v366
    %v432 = vunpack.c.l.b16 %v367
    %v433 = vunpack.c.l.b16 %v368
    %v434 = vunpack.c.l.b16 %v369
    %v435 = vpack.c.b16 %v428, %v427
    %v436 = vpack.c.b16 %v430, %v429
    %v437 = vpack.c.b16 %v432, %v431
    %v438 = vpack.c.b16 %v434, %v433
    %v440 = vsel %vm271, %v435, 0
    %v443 = vsel %vm271, %v436, 0
    %v446 = vsel %vm271, %v437, 0
    %v449 = vsel %vm271, %v438, 0
    %451 = vmatprep.subr.bf16.mxu0 0
    %452 = vmatpush1.bf16.msra.mxu0 %v357
    %453 = vmatprep.subr.bf16.mxu0 0
    %454 = vmatpush1.bf16.msra.mxu0 %v358
    %455 = vmatprep.subr.bf16.mxu0 0
    %456 = vmatpush1.bf16.msra.mxu0 %v359
    %457 = vmatprep.subr.bf16.mxu0 0
    %458 = vmatpush1.bf16.msra.mxu0 %v360
    %459 = vmatprep.subr.bf16.mxu0 0
    %460 = vmatpush1.bf16.msra.mxu0 0
    %461 = vmatprep.subr.bf16.mxu0 0
    %462 = vmatpush1.bf16.msra.mxu0 0
    %463 = vmatprep.subr.bf16.mxu0 0
    %464 = vmatpush1.bf16.msra.mxu0 0
    %465 = vmatprep.subr.bf16.mxu0 0
    %466 = vmatpush1.bf16.msra.mxu0 0
    %467 = vmatprep.subr.bf16.mxu0 0
    %468 = vmatpush1.bf16.msra.mxu0 0
    %469 = vmatprep.subr.bf16.mxu0 0
    %470 = vmatpush1.bf16.msra.mxu0 0
    %471 = vmatprep.subr.bf16.mxu0 0
    %472 = vmatpush1.bf16.msra.mxu0 0
    %473 = vmatprep.subr.bf16.mxu0 0
    %474 = vmatpush1.bf16.msra.mxu0 0
    %475 = vmatprep.subr.bf16.mxu0 0
    %476 = vmatpush1.bf16.msra.mxu0 0
    %477 = vmatprep.subr.bf16.mxu0 0
    %478 = vmatpush1.bf16.msra.mxu0 0
    %479 = vmatprep.subr.bf16.mxu0 0
    %480 = vmatpush1.bf16.msra.mxu0 0
    %481 = vmatprep.subr.bf16.mxu0 0
    %482 = vmatpush1.bf16.msra.mxu0 0
    %483 = vmatprep.mubr.bf16.mxu0 0
    %484 = vmatmul.mubr.bf16.gmra.mrb[0].mxu0 %v440
    %v485 = vpop.f32.mrb[0].mxu0
    %v486 = vadd.f32 %v382, %v485
    %v487 = vpop.f32.mrb[0].mxu0
    %v488 = vpop.f32.mrb[0].mxu0
    %v489 = vadd.f32 %v387, %v488
    %v490 = vpop.f32.mrb[0].mxu0
    %491 = vmatprep.mubr.bf16.mxu0 0
    %492 = vmatmul.mubr.bf16.gmra.mrb[0].mxu0 %v443
    %v493 = vpop.f32.mrb[0].mxu0
    %v494 = vadd.f32 %v392, %v493
    %v495 = vpop.f32.mrb[0].mxu0
    %v496 = vpop.f32.mrb[0].mxu0
    %v497 = vadd.f32 %v397, %v496
    %v498 = vpop.f32.mrb[0].mxu0
    %499 = vmatprep.mubr.bf16.mxu0 0
    %500 = vmatmul.mubr.bf16.gmra.mrb[0].mxu0 %v446
    %v501 = vpop.f32.mrb[0].mxu0
    %v502 = vadd.f32 %v402, %v501
    %v503 = vpop.f32.mrb[0].mxu0
    %v504 = vpop.f32.mrb[0].mxu0
    %v505 = vadd.f32 %v407, %v504
    %v506 = vpop.f32.mrb[0].mxu0
    %507 = vmatprep.mubr.bf16.mxu0 0
    %508 = vmatmul.mubr.bf16.gmra.mrb[0].mxu0 %v449
    %v509 = vpop.f32.mrb[0].mxu0
    %v510 = vadd.f32 %v412, %v509
    %v511 = vpop.f32.mrb[0].mxu0
    %v512 = vpop.f32.mrb[0].mxu0
    %v513 = vadd.f32 %v417, %v512
    %v514 = vpop.f32.mrb[0].mxu0
    %515 = vdwg.mxu0
    %v516 = vmax.f32 %v486, 0.0
    %v517 = vmax.f32 %v489, 0.0
    %v518 = vmax.f32 %v494, 0.0
    %v519 = vmax.f32 %v497, 0.0
    %v520 = vmax.f32 %v502, 0.0
    %v521 = vmax.f32 %v505, 0.0
    %v522 = vmax.f32 %v510, 0.0
    %v523 = vmax.f32 %v513, 0.0
    %v524 = vpack.c.bf16 %v517, %v516
    %v525 = vpack.c.bf16 %v519, %v518
    %v526 = vpack.c.bf16 %v521, %v520
    %v527 = vpack.c.bf16 %v523, %v522
    %s528 = scalar_lea.vmem %s2, 64
    %v529 = vld [vmem:[%s528] sm:$0xf]
    %v530 = vld [vmem:[%s528 + $0x4] sm:$0xf]
    %v531 = vld [vmem:[%s528 + $0x8] sm:$0xf]
    %v532 = vld [vmem:[%s528 + $0xc] sm:$0xf]
    %v533 = vld [vmem:[%s528 + $0x10] sm:$0xf]
    %v534 = vld [vmem:[%s528 + $0x14] sm:$0xf]
    %v535 = vld [vmem:[%s528 + $0x18] sm:$0xf]
    %v536 = vld [vmem:[%s528 + $0x1c] sm:$0xf]
    %s537 = scalar_lea.vmem %s3, 192
    %v538 = vld [vmem:[%s537] sm:$0xff]
    %v539 = vld [vmem:[%s537 + $0x8] sm:$0xff]
    %v540 = vld [vmem:[%s537 + $0x10] sm:$0xff]
    %v541 = vld [vmem:[%s537 + $0x18] sm:$0xff]
    %v542 = vld [vmem:[%s537 + $0x20] sm:$0xff]
    %v543 = vld [vmem:[%s537 + $0x28] sm:$0xff]
    %v544 = vld [vmem:[%s537 + $0x30] sm:$0xff]
    %v545 = vld [vmem:[%s537 + $0x38] sm:$0xff]
    %547 = vset.pattern.permute.xlu0 0
    %548 = vperm.xlu0 %547, %v538
    %v549 = vpop.permute.xlu0 %548
    %552 = vset.pattern.permute.xlu0 0
    %553 = vperm.xlu0 %552, %v539
    %v554 = vpop.permute.xlu0 %553
    %557 = vset.pattern.permute.xlu0 0
    %558 = vperm.xlu0 %557, %v540
    %v559 = vpop.permute.xlu0 %558
    %562 = vset.pattern.permute.xlu0 0
    %563 = vperm.xlu0 %562, %v541
    %v564 = vpop.permute.xlu0 %563
    %567 = vset.pattern.permute.xlu0 0
    %568 = vperm.xlu0 %567, %v542
    %v569 = vpop.permute.xlu0 %568
    %572 = vset.pattern.permute.xlu0 0
    %573 = vperm.xlu0 %572, %v543
    %v574 = vpop.permute.xlu0 %573
    %577 = vset.pattern.permute.xlu0 0
    %578 = vperm.xlu0 %577, %v544
    %v579 = vpop.permute.xlu0 %578
    %582 = vset.pattern.permute.xlu0 0
    %583 = vperm.xlu0 %582, %v545
    %v584 = vpop.permute.xlu0 %583
    %v594 = vunpack.c.l.b16 %v529
    %v595 = vunpack.c.l.b16 %v530
    %v596 = vunpack.c.l.b16 %v531
    %v597 = vunpack.c.l.b16 %v532
    %v598 = vunpack.c.l.b16 %v533
    %v599 = vunpack.c.l.b16 %v534
    %v600 = vunpack.c.l.b16 %v535
    %v601 = vunpack.c.l.b16 %v536
    %v602 = vpack.c.b16 %v595, %v594
    %v603 = vpack.c.b16 %v597, %v596
    %v604 = vpack.c.b16 %v599, %v598
    %v605 = vpack.c.b16 %v601, %v600
    %v607 = vsel %vm271, %v602, 0
    %v610 = vsel %vm271, %v603, 0
    %v613 = vsel %vm271, %v604, 0
    %v616 = vsel %vm271, %v605, 0
    %618 = vmatprep.subr.bf16.mxu0 0
    %619 = vmatpush1.bf16.msra.mxu0 %v524
    %620 = vmatprep.subr.bf16.mxu0 0
    %621 = vmatpush1.bf16.msra.mxu0 %v525
    %622 = vmatprep.subr.bf16.mxu0 0
    %623 = vmatpush1.bf16.msra.mxu0 %v526
    %624 = vmatprep.subr.bf16.mxu0 0
    %625 = vmatpush1.bf16.msra.mxu0 %v527
    %626 = vmatprep.subr.bf16.mxu0 0
    %627 = vmatpush1.bf16.msra.mxu0 0
    %628 = vmatprep.subr.bf16.mxu0 0
    %629 = vmatpush1.bf16.msra.mxu0 0
    %630 = vmatprep.subr.bf16.mxu0 0
    %631 = vmatpush1.bf16.msra.mxu0 0
    %632 = vmatprep.subr.bf16.mxu0 0
    %633 = vmatpush1.bf16.msra.mxu0 0
    %634 = vmatprep.subr.bf16.mxu0 0
    %635 = vmatpush1.bf16.msra.mxu0 0
    %636 = vmatprep.subr.bf16.mxu0 0
    %637 = vmatpush1.bf16.msra.mxu0 0
    %638 = vmatprep.subr.bf16.mxu0 0
    %639 = vmatpush1.bf16.msra.mxu0 0
    %640 = vmatprep.subr.bf16.mxu0 0
    %641 = vmatpush1.bf16.msra.mxu0 0
    %642 = vmatprep.subr.bf16.mxu0 0
    %643 = vmatpush1.bf16.msra.mxu0 0
    %644 = vmatprep.subr.bf16.mxu0 0
    %645 = vmatpush1.bf16.msra.mxu0 0
    %646 = vmatprep.subr.bf16.mxu0 0
    %647 = vmatpush1.bf16.msra.mxu0 0
    %648 = vmatprep.subr.bf16.mxu0 0
    %649 = vmatpush1.bf16.msra.mxu0 0
    %650 = vmatprep.mubr.bf16.mxu0 0
    %651 = vmatmul.mubr.bf16.gmra.mrb[0].mxu0 %v607
    %v652 = vpop.f32.mrb[0].mxu0
    %v653 = vadd.f32 %v549, %v652
    %v654 = vpop.f32.mrb[0].mxu0
    %v655 = vpop.f32.mrb[0].mxu0
    %v656 = vadd.f32 %v554, %v655
    %v657 = vpop.f32.mrb[0].mxu0
    %658 = vmatprep.mubr.bf16.mxu0 0
    %659 = vmatmul.mubr.bf16.gmra.mrb[0].mxu0 %v610
    %v660 = vpop.f32.mrb[0].mxu0
    %v661 = vadd.f32 %v559, %v660
    %v662 = vpop.f32.mrb[0].mxu0
    %v663 = vpop.f32.mrb[0].mxu0
    %v664 = vadd.f32 %v564, %v663
    %v665 = vpop.f32.mrb[0].mxu0
    %666 = vmatprep.mubr.bf16.mxu0 0
    %667 = vmatmul.mubr.bf16.gmra.mrb[0].mxu0 %v613
    %v668 = vpop.f32.mrb[0].mxu0
    %v669 = vadd.f32 %v569, %v668
    %v670 = vpop.f32.mrb[0].mxu0
    %v671 = vpop.f32.mrb[0].mxu0
    %v672 = vadd.f32 %v574, %v671
    %v673 = vpop.f32.mrb[0].mxu0
    %674 = vmatprep.mubr.bf16.mxu0 0
    %675 = vmatmul.mubr.bf16.gmra.mrb[0].mxu0 %v616
    %v676 = vpop.f32.mrb[0].mxu0
    %v677 = vadd.f32 %v579, %v676
    %v678 = vpop.f32.mrb[0].mxu0
    %v679 = vpop.f32.mrb[0].mxu0
    %v680 = vadd.f32 %v584, %v679
    %v681 = vpop.f32.mrb[0].mxu0
    %682 = vdwg.mxu0
    %v683 = vmax.f32 %v653, 0.0
    %v684 = vmax.f32 %v656, 0.0
    %v685 = vmax.f32 %v661, 0.0
    %v686 = vmax.f32 %v664, 0.0
    %v687 = vmax.f32 %v669, 0.0
    %v688 = vmax.f32 %v672, 0.0
    %v689 = vmax.f32 %v677, 0.0
    %v690 = vmax.f32 %v680, 0.0
    %v691 = vpack.c.bf16 %v684, %v683
    %v692 = vpack.c.bf16 %v686, %v685
    %v693 = vpack.c.bf16 %v688, %v687
    %v694 = vpack.c.bf16 %v690, %v689
    %s695 = scalar_lea.vmem %s2, 96
    %v696 = vld [vmem:[%s695] sm:$0xf]
    %v697 = vld [vmem:[%s695 + $0x4] sm:$0xf]
    %v698 = vld [vmem:[%s695 + $0x8] sm:$0xf]
    %v699 = vld [vmem:[%s695 + $0xc] sm:$0xf]
    %v700 = vld [vmem:[%s695 + $0x10] sm:$0xf]
    %v701 = vld [vmem:[%s695 + $0x14] sm:$0xf]
    %v702 = vld [vmem:[%s695 + $0x18] sm:$0xf]
    %v703 = vld [vmem:[%s695 + $0x1c] sm:$0xf]
    %s704 = scalar_lea.vmem %s3, 256
    %v705 = vld [vmem:[%s704] sm:$0xff]
    %v706 = vld [vmem:[%s704 + $0x8] sm:$0xff]
    %v707 = vld [vmem:[%s704 + $0x10] sm:$0xff]
    %v708 = vld [vmem:[%s704 + $0x18] sm:$0xff]
    %v709 = vld [vmem:[%s704 + $0x20] sm:$0xff]
    %v710 = vld [vmem:[%s704 + $0x28] sm:$0xff]
    %v711 = vld [vmem:[%s704 + $0x30] sm:$0xff]
    %v712 = vld [vmem:[%s704 + $0x38] sm:$0xff]
    %714 = vset.pattern.permute.xlu0 0
    %715 = vperm.xlu0 %714, %v705
    %v716 = vpop.permute.xlu0 %715
    %719 = vset.pattern.permute.xlu0 0
    %720 = vperm.xlu0 %719, %v706
    %v721 = vpop.permute.xlu0 %720
    %724 = vset.pattern.permute.xlu0 0
    %725 = vperm.xlu0 %724, %v707
    %v726 = vpop.permute.xlu0 %725
    %729 = vset.pattern.permute.xlu0 0
    %730 = vperm.xlu0 %729, %v708
    %v731 = vpop.permute.xlu0 %730
    %734 = vset.pattern.permute.xlu0 0
    %735 = vperm.xlu0 %734, %v709
    %v736 = vpop.permute.xlu0 %735
    %739 = vset.pattern.permute.xlu0 0
    %740 = vperm.xlu0 %739, %v710
    %v741 = vpop.permute.xlu0 %740
    %744 = vset.pattern.permute.xlu0 0
    %745 = vperm.xlu0 %744, %v711
    %v746 = vpop.permute.xlu0 %745
    %749 = vset.pattern.permute.xlu0 0
    %750 = vperm.xlu0 %749, %v712
    %v751 = vpop.permute.xlu0 %750
    %v761 = vunpack.c.l.b16 %v696
    %v762 = vunpack.c.l.b16 %v697
    %v763 = vunpack.c.l.b16 %v698
    %v764 = vunpack.c.l.b16 %v699
    %v765 = vunpack.c.l.b16 %v700
    %v766 = vunpack.c.l.b16 %v701
    %v767 = vunpack.c.l.b16 %v702
    %v768 = vunpack.c.l.b16 %v703
    %v769 = vpack.c.b16 %v762, %v761
    %v770 = vpack.c.b16 %v764, %v763
    %v771 = vpack.c.b16 %v766, %v765
    %v772 = vpack.c.b16 %v768, %v767
    %v774 = vsel %vm271, %v769, 0
    %v777 = vsel %vm271, %v770, 0
    %v780 = vsel %vm271, %v771, 0
    %v783 = vsel %vm271, %v772, 0
    %785 = vmatprep.subr.bf16.mxu0 0
    %786 = vmatpush1.bf16.msra.mxu0 %v691
    %787 = vmatprep.subr.bf16.mxu0 0
    %788 = vmatpush1.bf16.msra.mxu0 %v692
    %789 = vmatprep.subr.bf16.mxu0 0
    %790 = vmatpush1.bf16.msra.mxu0 %v693
    %791 = vmatprep.subr.bf16.mxu0 0
    %792 = vmatpush1.bf16.msra.mxu0 %v694
    %793 = vmatprep.subr.bf16.mxu0 0
    %794 = vmatpush1.bf16.msra.mxu0 0
    %795 = vmatprep.subr.bf16.mxu0 0
    %796 = vmatpush1.bf16.msra.mxu0 0
    %797 = vmatprep.subr.bf16.mxu0 0
    %798 = vmatpush1.bf16.msra.mxu0 0
    %799 = vmatprep.subr.bf16.mxu0 0
    %800 = vmatpush1.bf16.msra.mxu0 0
    %801 = vmatprep.subr.bf16.mxu0 0
    %802 = vmatpush1.bf16.msra.mxu0 0
    %803 = vmatprep.subr.bf16.mxu0 0
    %804 = vmatpush1.bf16.msra.mxu0 0
    %805 = vmatprep.subr.bf16.mxu0 0
    %806 = vmatpush1.bf16.msra.mxu0 0
    %807 = vmatprep.subr.bf16.mxu0 0
    %808 = vmatpush1.bf16.msra.mxu0 0
    %809 = vmatprep.subr.bf16.mxu0 0
    %810 = vmatpush1.bf16.msra.mxu0 0
    %811 = vmatprep.subr.bf16.mxu0 0
    %812 = vmatpush1.bf16.msra.mxu0 0
    %813 = vmatprep.subr.bf16.mxu0 0
    %814 = vmatpush1.bf16.msra.mxu0 0
    %815 = vmatprep.subr.bf16.mxu0 0
    %816 = vmatpush1.bf16.msra.mxu0 0
    %817 = vmatprep.mubr.bf16.mxu0 0
    %818 = vmatmul.mubr.bf16.gmra.mrb[0].mxu0 %v774
    %v819 = vpop.f32.mrb[0].mxu0
    %v820 = vadd.f32 %v716, %v819
    %v821 = vpop.f32.mrb[0].mxu0
    %v822 = vpop.f32.mrb[0].mxu0
    %v823 = vadd.f32 %v721, %v822
    %v824 = vpop.f32.mrb[0].mxu0
    %825 = vmatprep.mubr.bf16.mxu0 0
    %826 = vmatmul.mubr.bf16.gmra.mrb[0].mxu0 %v777
    %v827 = vpop.f32.mrb[0].mxu0
    %v828 = vadd.f32 %v726, %v827
    %v829 = vpop.f32.mrb[0].mxu0
    %v830 = vpop.f32.mrb[0].mxu0
    %v831 = vadd.f32 %v731, %v830
    %v832 = vpop.f32.mrb[0].mxu0
    %833 = vmatprep.mubr.bf16.mxu0 0
    %834 = vmatmul.mubr.bf16.gmra.mrb[0].mxu0 %v780
    %v835 = vpop.f32.mrb[0].mxu0
    %v836 = vadd.f32 %v736, %v835
    %v837 = vpop.f32.mrb[0].mxu0
    %v838 = vpop.f32.mrb[0].mxu0
    %v839 = vadd.f32 %v741, %v838
    %v840 = vpop.f32.mrb[0].mxu0
    %841 = vmatprep.mubr.bf16.mxu0 0
    %842 = vmatmul.mubr.bf16.gmra.mrb[0].mxu0 %v783
    %v843 = vpop.f32.mrb[0].mxu0
    %v844 = vadd.f32 %v746, %v843
    %v845 = vpop.f32.mrb[0].mxu0
    %v846 = vpop.f32.mrb[0].mxu0
    %v847 = vadd.f32 %v751, %v846
    %v848 = vpop.f32.mrb[0].mxu0
    %849 = vdwg.mxu0
    %v850 = vmax.f32 %v820, 0.0
    %v851 = vmax.f32 %v823, 0.0
    %v852 = vmax.f32 %v828, 0.0
    %v853 = vmax.f32 %v831, 0.0
    %v854 = vmax.f32 %v836, 0.0
    %v855 = vmax.f32 %v839, 0.0
    %v856 = vmax.f32 %v844, 0.0
    %v857 = vmax.f32 %v847, 0.0
    %v858 = vpack.c.bf16 %v851, %v850
    %v859 = vpack.c.bf16 %v853, %v852
    %v860 = vpack.c.bf16 %v855, %v854
    %v861 = vpack.c.bf16 %v857, %v856
    %s862 = scalar_lea.vmem %s2, 128
    %v863 = vld [vmem:[%s862] sm:$0xf]
    %v864 = vld [vmem:[%s862 + $0x4] sm:$0xf]
    %v865 = vld [vmem:[%s862 + $0x8] sm:$0xf]
    %v866 = vld [vmem:[%s862 + $0xc] sm:$0xf]
    %v867 = vld [vmem:[%s862 + $0x10] sm:$0xf]
    %v868 = vld [vmem:[%s862 + $0x14] sm:$0xf]
    %v869 = vld [vmem:[%s862 + $0x18] sm:$0xf]
    %v870 = vld [vmem:[%s862 + $0x1c] sm:$0xf]
    %s871 = scalar_lea.vmem %s3, 320
    %v872 = vld [vmem:[%s871] sm:$0xff]
    %v873 = vld [vmem:[%s871 + $0x8] sm:$0xff]
    %v874 = vld [vmem:[%s871 + $0x10] sm:$0xff]
    %v875 = vld [vmem:[%s871 + $0x18] sm:$0xff]
    %v876 = vld [vmem:[%s871 + $0x20] sm:$0xff]
    %v877 = vld [vmem:[%s871 + $0x28] sm:$0xff]
    %v878 = vld [vmem:[%s871 + $0x30] sm:$0xff]
    %v879 = vld [vmem:[%s871 + $0x38] sm:$0xff]
    %881 = vset.pattern.permute.xlu0 0
    %882 = vperm.xlu0 %881, %v872
    %v883 = vpop.permute.xlu0 %882
    %886 = vset.pattern.permute.xlu0 0
    %887 = vperm.xlu0 %886, %v873
    %v888 = vpop.permute.xlu0 %887
    %891 = vset.pattern.permute.xlu0 0
    %892 = vperm.xlu0 %891, %v874
    %v893 = vpop.permute.xlu0 %892
    %896 = vset.pattern.permute.xlu0 0
    %897 = vperm.xlu0 %896, %v875
    %v898 = vpop.permute.xlu0 %897
    %900 = vset.pattern.permute.xlu0 0
    %901 = vperm.xlu0 %900, %v876
    %v902 = vpop.permute.xlu0 %901
    %904 = vset.pattern.permute.xlu0 0
    %905 = vperm.xlu0 %904, %v877
    %v906 = vpop.permute.xlu0 %905
    %908 = vset.pattern.permute.xlu0 0
    %909 = vperm.xlu0 %908, %v878
    %v910 = vpop.permute.xlu0 %909
    %912 = vset.pattern.permute.xlu0 0
    %913 = vperm.xlu0 %912, %v879
    %v914 = vpop.permute.xlu0 %913
    %v923 = vunpack.c.l.b16 %v863
    %v924 = vunpack.c.l.b16 %v864
    %v925 = vunpack.c.l.b16 %v865
    %v926 = vunpack.c.l.b16 %v866
    %v927 = vunpack.c.l.b16 %v867
    %v928 = vunpack.c.l.b16 %v868
    %v929 = vunpack.c.l.b16 %v869
    %v930 = vunpack.c.l.b16 %v870
    %v931 = vpack.c.b16 %v924, %v923
    %v932 = vpack.c.b16 %v926, %v925
    %v933 = vpack.c.b16 %v928, %v927
    %v934 = vpack.c.b16 %v930, %v929
    %v936 = vsel %vm271, %v931, 0
    %v939 = vsel %vm271, %v932, 0
    %v942 = vsel %vm271, %v933, 0
    %v945 = vsel %vm271, %v934, 0
    %947 = vmatprep.subr.bf16.mxu0 0
    %948 = vmatpush1.bf16.msra.mxu0 %v858
    %949 = vmatprep.subr.bf16.mxu0 0
    %950 = vmatpush1.bf16.msra.mxu0 %v859
    %951 = vmatprep.subr.bf16.mxu0 0
    %952 = vmatpush1.bf16.msra.mxu0 %v860
    %953 = vmatprep.subr.bf16.mxu0 0
    %954 = vmatpush1.bf16.msra.mxu0 %v861
    %955 = vmatprep.subr.bf16.mxu0 0
    %956 = vmatpush1.bf16.msra.mxu0 0
    %957 = vmatprep.subr.bf16.mxu0 0
    %958 = vmatpush1.bf16.msra.mxu0 0
    %959 = vmatprep.subr.bf16.mxu0 0
    %960 = vmatpush1.bf16.msra.mxu0 0
    %961 = vmatprep.subr.bf16.mxu0 0
    %962 = vmatpush1.bf16.msra.mxu0 0
    %963 = vmatprep.subr.bf16.mxu0 0
    %964 = vmatpush1.bf16.msra.mxu0 0
    %965 = vmatprep.subr.bf16.mxu0 0
    %966 = vmatpush1.bf16.msra.mxu0 0
    %967 = vmatprep.subr.bf16.mxu0 0
    %968 = vmatpush1.bf16.msra.mxu0 0
    %969 = vmatprep.subr.bf16.mxu0 0
    %970 = vmatpush1.bf16.msra.mxu0 0
    %971 = vmatprep.subr.bf16.mxu0 0
    %972 = vmatpush1.bf16.msra.mxu0 0
    %973 = vmatprep.subr.bf16.mxu0 0
    %974 = vmatpush1.bf16.msra.mxu0 0
    %975 = vmatprep.subr.bf16.mxu0 0
    %976 = vmatpush1.bf16.msra.mxu0 0
    %977 = vmatprep.subr.bf16.mxu0 0
    %978 = vmatpush1.bf16.msra.mxu0 0
    %979 = vmatprep.mubr.bf16.mxu0 0
    %980 = vmatmul.mubr.bf16.gmra.mrb[0].mxu0 %v936
    %v981 = vpop.f32.mrb[0].mxu0
    %v982 = vadd.f32 %v883, %v981
    %v983 = vpop.f32.mrb[0].mxu0
    %v984 = vpop.f32.mrb[0].mxu0
    %v985 = vadd.f32 %v888, %v984
    %v986 = vpop.f32.mrb[0].mxu0
    %987 = vmatprep.mubr.bf16.mxu0 0
    %988 = vmatmul.mubr.bf16.gmra.mrb[0].mxu0 %v939
    %v989 = vpop.f32.mrb[0].mxu0
    %v990 = vadd.f32 %v893, %v989
    %v991 = vpop.f32.mrb[0].mxu0
    %v992 = vpop.f32.mrb[0].mxu0
    %v993 = vpop.f32.mrb[0].mxu0
    %994 = vmatprep.mubr.bf16.mxu0 0
    %995 = vmatmul.mubr.bf16.gmra.mrb[0].mxu0 %v942
    %v996 = vpop.f32.mrb[0].mxu0
    %v997 = vpop.f32.mrb[0].mxu0
    %v998 = vpop.f32.mrb[0].mxu0
    %v999 = vpop.f32.mrb[0].mxu0
    %1000 = vmatprep.mubr.bf16.mxu0 0
    %1001 = vmatmul.mubr.bf16.gmra.mrb[0].mxu0 %v945
    %v1002 = vpop.f32.mrb[0].mxu0
    %v1003 = vpop.f32.mrb[0].mxu0
    %v1004 = vpop.f32.mrb[0].mxu0
    %v1005 = vpop.f32.mrb[0].mxu0
    %1006 = vdwg.mxu0
    %1007 = vst [vmem:[#allocation2] sm:$0xff] %v982
    %1008 = vst [vmem:[#allocation2 + $0x8] sm:$0xff] %v985
    %1009 = vst [vmem:[#allocation2 + $0x10] sm:$0xf] %v990
    // Predicated region
    $region18: #{tpu_custom_call.1} parent=1 // pred_check
      _
    $region19: #{tpu_custom_call.1} parent=1 // pred_check_branch
      %1011 = sbr.rel (0) target = $region21
    $region20: #{tpu_custom_call.1} parent=1 // pred_region
      %s1013 = ssub.s32 384, 384
      %1014 = vsyncadd [#allocation3], %s1013
      %s1015 = sshll.u32 [#allocation2], 4
      %s1016 = int_to_ptr.vmem [resolvable:$true] %s1015
      %1021 = dma.vmem_to_hbm [thread:$0]  %s1016, 384, %s4, [#allocation3], 128, 128, 8
    $region21: #{tpu_custom_call.1} parent=1 // pred_fallthru
      _
    // Predicated region
    $region22: #{tpu_custom_call.1} parent=1 // pred_check
      _
    $region23: #{tpu_custom_call.1} parent=1 // pred_check_branch
      %1023 = sbr.rel (0) target = $region25
    $region24: #{tpu_custom_call.1} parent=1 // pred_region
      %1024 = dma.done [#allocation3], 384
    $region25: #{tpu_custom_call.1} parent=1 // pred_fallthru
      _
    %1025 = vsyncpa [#allocation3], 1

</llo_original>
